<compile_context>
chip_gen: v7x
topology: tpu7x:2x2x1
jax: 0.10.0
libtpu: 0.0.40
codegen_flags: <defaults>
</compile_context>

<pallas_src>
import numpy as np
import jax
import jax.numpy as jnp
from jax import lax
from jax.experimental import pallas as pl
from jax.experimental.pallas import tpu as pltpu


def _length_regulator_kernel(mel_len_ref, cums_ref, x_ref, out_ref):
    # mel_len_ref: (B,)   i32 SMEM (scalar prefetch) -- per-batch true lengths
    # cums_ref:    (1, 2, S) i32  row 0 = exclusive cumsum, row 1 = inclusive
    # x_ref:       (1, S, D)      input frames for this batch element
    # out_ref:     (1, tT, D)     one output-time tile (expanded + zero-padded)
    S = x_ref.shape[1]
    tT = out_ref.shape[1]
    b = pl.program_id(0)
    t0 = pl.program_id(1) * tT

    tile_is_active = t0 < mel_len_ref[b]

    @pl.when(tile_is_active)
    def _compute():
        cums = cums_ref[0]                       # (2, S) i32
        cexc = cums[0:1, :]                      # (1, S) exclusive cumsum
        cinc = cums[1:2, :]                      # (1, S) inclusive cumsum

        # Absolute output-time indices covered by this tile.
        t_idx = t0 + lax.broadcasted_iota(jnp.int32, (tT, S), 0)   # (tT, S)

        # One-hot selection matrix in the matmul input dtype.  Each row has at
        # most one 1 (non-negative durations), so W @ x is an exact row
        # selection even in bf16; rows with t >= mel_len are all-zero and
        # reproduce the zero padding.
        W = ((t_idx >= cexc) & (t_idx < cinc)).astype(x_ref.dtype)  # (tT, S)

        out = jnp.dot(W, x_ref[0], preferred_element_type=jnp.float32)
        out_ref[0] = out.astype(out_ref.dtype)

    @pl.when(jnp.logical_not(tile_is_active))
    def _pad():
        # Fully past the true sequence: skip all compute, just emit zeros.
        out_ref[...] = jnp.zeros_like(out_ref)


def _choose_time_tile(max_len, S, D, elem_bytes, t_tile, budget_bytes):
    """Pick an output-time tile that fits a conservative VMEM budget."""
    def est(t):
        out_blk = 2 * t * D * elem_bytes          # double-buffered output block
        x_blk = 2 * S * D * elem_bytes            # double-buffered x block
        cums_blk = 2 * 2 * S * 4                  # double-buffered cumsum block
        temps = t * S * (4 + 4 + elem_bytes)      # iota + compare + W temps
        acc = t * D * 4                           # f32 matmul result
        return out_blk + x_blk + cums_blk + temps + acc

    tT = min(t_tile, max_len)
    if tT != max_len:
        tT = max(8, (tT // 8) * 8)
    while tT > 8 and est(tT) > budget_bytes:
        tT = max(8, ((tT // 2) // 8) * 8)
    return tT, est(tT)


def length_regulator(x, duration, max_len, *, t_tile=1024):
    """x: (B, S, D) float, duration: (B, S) int, max_len: static int.

    Returns (output (B, max_len, D), mel_len (B,) int32).  If sum(duration[b])
    exceeds max_len the output is truncated (exactly like pad-to-max_len in the
    reference); mel_len still returns the full un-truncated sum, matching the
    PyTorch module.
    """
    B, S, D = x.shape
    dur = duration.astype(jnp.int32)

    # Exact integer prefix sums, hoisted out of the kernel (computed once).
    cum_inc = jnp.cumsum(dur, axis=-1)                      # (B, S) i32
    cum_exc = cum_inc - dur                                 # (B, S) i32
    mel_len = cum_inc[:, -1]                                # (B,)   i32
    cums = jnp.stack([cum_exc, cum_inc], axis=1)            # (B, 2, S) i32

    elem_bytes = jnp.dtype(x.dtype).itemsize
    # ~20 MiB working-set budget keeps double-buffered blocks comfortably
    # inside v7x's 64 MiB physical VMEM while staying large on v5e/v6e.
    tT, vmem_est = _choose_time_tile(max_len, S, D, elem_bytes, t_tile,
                                     budget_bytes=20 * 1024 * 1024)
    nT = pl.cdiv(max_len, tT)
    vmem_limit = int(min(max(2 * vmem_est, 32 * 1024 * 1024),
                         48 * 1024 * 1024))

    out = pl.pallas_call(
        _length_regulator_kernel,
        out_shape=jax.ShapeDtypeStruct((B, max_len, D), x.dtype),
        grid_spec=pltpu.PrefetchScalarGridSpec(
            num_scalar_prefetch=1,                 # mel_len -> SMEM
            grid=(B, nT),
            in_specs=[
                pl.BlockSpec((1, 2, S), lambda b, t, ml: (b, 0, 0)),  # cumsums
                pl.BlockSpec((1, S, D), lambda b, t, ml: (b, 0, 0)),  # x[b]
            ],
            out_specs=pl.BlockSpec((1, tT, D), lambda b, t, ml: (b, t, 0)),
        ),
        compiler_params=pltpu.CompilerParams(
            dimension_semantics=("parallel", "parallel"),
            vmem_limit_bytes=vmem_limit),
    )(mel_len, cums, x)

    return out, mel_len


if __name__ == "__main__":
    B, S, D = 2, 8, 128
    MAX_LEN = 64

    key = jax.random.PRNGKey(0)
    kx, kd = jax.random.split(key)
    x = jax.random.normal(kx, (B, S, D), dtype=jnp.float32)
    duration = jax.random.randint(kd, (B, S), minval=1, maxval=7, dtype=jnp.int32)

    # Small time tile so the padded-tile skip path (pl.when else-branch) is
    # actually exercised at this toy size.
    out, mel_len = length_regulator(x, duration, MAX_LEN, t_tile=16)
    out = jax.block_until_ready(out)
    mel_len = jax.block_until_ready(mel_len)

    # Reference (numpy) check of the PyTorch semantics.
    x_np = np.asarray(x)
    dur_np = np.asarray(duration)
    expected = np.zeros((B, MAX_LEN, D), np.float32)
    expected_len = np.zeros((B,), np.int32)
    for b in range(B):
        rows = np.repeat(x_np[b], dur_np[b], axis=0)
        n = min(rows.shape[0], MAX_LEN)
        expected[b, :n] = rows[:n]
        expected_len[b] = rows.shape[0]

    assert out.shape == (B, MAX_LEN, D)
    assert np.allclose(np.asarray(out), expected, atol=1e-5, rtol=1e-5)
    assert np.array_equal(np.asarray(mel_len), expected_len)

    print("KERNEL_OK")
</pallas_src>

<mosaic_0001>
module attributes {stable_mosaic.version = 11 : i64} {
  func.func @_length_regulator_kernel(%arg0: i32, %arg1: i32, %arg2: memref<2xi32, #tpu.memory_space<smem>>, %arg3: memref<1x2x8xi32, #tpu.memory_space<vmem>>, %arg4: memref<1x8x128xf32, #tpu.memory_space<vmem>>, %arg5: memref<1x16x128xf32, #tpu.memory_space<vmem>>) attributes {dimension_semantics = [#tpu.dimension_semantics<parallel>, #tpu.dimension_semantics<parallel>], iteration_bounds = array<i64: 2, 4>, scalar_prefetch = 1 : i64, scratch_operands = 0 : i64, tpu.core_type = #tpu.core_type<tc>, window_params = [{transform_indices = @transform_0, window_bounds = array<i64: 1, 2, 8>}, {transform_indices = @transform_1, window_bounds = array<i64: 1, 8, 128>}, {transform_indices = @transform_2, window_bounds = array<i64: 1, 16, 128>}]} {
    %c16_i32 = arith.constant 16 : i32
    %0 = arith.muli %arg1, %c16_i32 : i32
    %1 = arith.index_cast %arg0 : i32 to index
    %2 = memref.load %arg2[%1] : memref<2xi32, #tpu.memory_space<smem>>
    %3 = arith.cmpi slt, %0, %2 : i32
    %4 = arith.extui %3 : i1 to i32
    %c0_i32 = arith.constant 0 : i32
    %5 = arith.cmpi ne, %4, %c0_i32 : i32
    scf.if %5 {
      %c0 = arith.constant 0 : index
      %c0_1 = arith.constant 0 : index
      %c0_2 = arith.constant 0 : index
      %9 = vector.load %arg3[%c0, %c0_1, %c0_2] : memref<1x2x8xi32, #tpu.memory_space<vmem>>, vector<1x2x8xi32>
      %10 = vector.shape_cast %9 : vector<1x2x8xi32> to vector<2x8xi32>
      %11 = vector.extract_strided_slice %10 {offsets = [0, 0], sizes = [1, 8], strides = [1, 1]} : vector<2x8xi32> to vector<1x8xi32>
      %12 = vector.extract_strided_slice %10 {offsets = [1, 0], sizes = [1, 8], strides = [1, 1]} : vector<2x8xi32> to vector<1x8xi32>
      %13 = tpu.iota {dimensions = array<i32: 0>} : vector<16x8xi32>
      %14 = vector.broadcast %0 : i32 to vector<16x8xi32>
      %15 = arith.addi %14, %13 : vector<16x8xi32>
      %16 = vector.broadcast %11 : vector<1x8xi32> to vector<16x8xi32>
      %17 = arith.cmpi sge, %15, %16 : vector<16x8xi32>
      %18 = vector.broadcast %12 : vector<1x8xi32> to vector<16x8xi32>
      %19 = arith.cmpi slt, %15, %18 : vector<16x8xi32>
      %20 = arith.andi %17, %19 : vector<16x8xi1>
      %21 = arith.extui %20 : vector<16x8xi1> to vector<16x8xi32>
      %22 = arith.sitofp %21 : vector<16x8xi32> to vector<16x8xf32>
      %c0_3 = arith.constant 0 : index
      %c0_4 = arith.constant 0 : index
      %c0_5 = arith.constant 0 : index
      %23 = vector.load %arg4[%c0_3, %c0_4, %c0_5] : memref<1x8x128xf32, #tpu.memory_space<vmem>>, vector<1x8x128xf32>
      %24 = vector.shape_cast %23 : vector<1x8x128xf32> to vector<8x128xf32>
      %cst = arith.constant dense<0.000000e+00> : vector<16x128xf32>
      %25 = tpu.matmul %22, %24, %cst {dimension_numbers = #tpu.dot_dimension_numbers<[1], [0], [0], [1], [0, 0, 1, 1], [], []>} : vector<16x8xf32>, vector<8x128xf32>, vector<16x128xf32> -> vector<16x128xf32>
      %c0_6 = arith.constant 0 : index
      %c0_7 = arith.constant 0 : index
      %c0_8 = arith.constant 0 : index
      %26 = vector.load %arg5[%c0_6, %c0_7, %c0_8] : memref<1x16x128xf32, #tpu.memory_space<vmem>>, vector<1x16x128xf32>
      %27 = vector.shape_cast %26 : vector<1x16x128xf32> to vector<16x128xf32>
      %28 = vector.shape_cast %25 : vector<16x128xf32> to vector<1x16x128xf32>
      tpu.vector_store %arg5[%c0_6, %c0_7, %c0_8], %28 {strides = array<i32>} : memref<1x16x128xf32, #tpu.memory_space<vmem>>, vector<1x16x128xf32>,
    } else {
    }
    %true = arith.constant true
    %6 = arith.xori %3, %true : i1
    %7 = arith.extui %6 : i1 to i32
    %c0_i32_0 = arith.constant 0 : i32
    %8 = arith.cmpi ne, %7, %c0_i32_0 : i32
    scf.if %8 {
      %cst = arith.constant 0.000000e+00 : f32
      %9 = vector.broadcast %cst : f32 to vector<1x16x128xf32>
      %c0 = arith.constant 0 : index
      %c0_1 = arith.constant 0 : index
      %c0_2 = arith.constant 0 : index
      %10 = vector.load %arg5[%c0, %c0_1, %c0_2] : memref<1x16x128xf32, #tpu.memory_space<vmem>>, vector<1x16x128xf32>
      tpu.vector_store %arg5[%c0, %c0_1, %c0_2], %9 {strides = array<i32>} : memref<1x16x128xf32, #tpu.memory_space<vmem>>, vector<1x16x128xf32>,
    } else {
    }
    return
  }
  func.func @transform_0(%arg0: i32, %arg1: i32, %arg2: memref<2xi32, #tpu.memory_space<smem>>) -> (i32, i32, i32) {
    %c0_i32 = arith.constant 0 : i32
    %c0_i32_0 = arith.constant 0 : i32
    %c0_i32_1 = arith.constant 0 : i32
    return %arg0, %c0_i32, %c0_i32_0 : i32, i32, i32
  }
  func.func @transform_1(%arg0: i32, %arg1: i32, %arg2: memref<2xi32, #tpu.memory_space<smem>>) -> (i32, i32, i32) {
    %c0_i32 = arith.constant 0 : i32
    %c0_i32_0 = arith.constant 0 : i32
    %c0_i32_1 = arith.constant 0 : i32
    return %arg0, %c0_i32, %c0_i32_0 : i32, i32, i32
  }
  func.func @transform_2(%arg0: i32, %arg1: i32, %arg2: memref<2xi32, #tpu.memory_space<smem>>) -> (i32, i32, i32) {
    %c0_i32 = arith.constant 0 : i32
    %c0_i32_0 = arith.constant 0 : i32
    return %arg0, %arg1, %c0_i32 : i32, i32, i32
  }
}

</mosaic_0001>

<llo_original>
// kernel: tpu_custom_call.1
$region0: #{tpu_custom_call.1}
  #allocation0 [shape = 'u32[]', space=smem, size = 0x4, offset = 0x4, fixed_abs, tag = 'smem constant byte address 0x4 - core index']
  #allocation1 [shape = 'u32[144,128]{1,0:T(1,128)}', space=vmem, size = 0x12000, scoped, tag = 'internal scratch']
  #allocation2 [shape = 's32[1]{0}', space=sflag, size = 0x4, scoped, tag = 'scoped memory for tpu_custom_call.1']
  #allocation3 [shape = 'u8[512]{0}', space=smem, size = 0x200, scoped, tag = 'prefetched SMEM operand 0']
  %s0 = inlined_call_operand.hbm [shape: s32[2], index: 0, kind: input, shape index: {}]
  %s1 = inlined_call_operand.hbm [shape: s32[2,2,8], index: 1, kind: input, shape index: {}]
  %s2 = inlined_call_operand.hbm [shape: f32[2,8,128], index: 2, kind: input, shape index: {}]
  %s3 = inlined_call_operand.hbm [shape: f32[2,64,128], index: 3, kind: output, shape index: {}]
  %s4 = sld [smem:[#allocation0]]
  $region57: #{tpu_custom_call.1} parent=0
    _
  %s6 = ssub.s32 1, %s4
  %s7 = scalar_select 0, %s6, %s4
  %9 = dma.hbm_to_smem %s0, 16, [#allocation3], [#allocation2]
  %10 = dma.done [#allocation2], 16
  %11 = sfence
  $region1: #{tpu_custom_call.1} parent=0
    #allocation4 [shape = 'u8[2048]{0}', space=vmem, size = 0x800, scoped, tag = 'input window, operand 1']
    #allocation5 [shape = 's32[2]{0}', space=sflag, size = 0x8, scoped, tag = 'scoped memory for tpu_custom_call.1']
    #allocation6 [shape = 's32[2]{0}', space=sflag, size = 0x8, scoped, tag = 'scoped memory for tpu_custom_call.1']
    #allocation7 [shape = 'u8[8192]{0}', space=vmem, size = 0x2000, scoped, tag = 'input window, operand 2']
    #allocation8 [shape = 's32[2]{0}', space=sflag, size = 0x8, scoped, tag = 'scoped memory for tpu_custom_call.1']
    #allocation9 [shape = 'u8[16384]{0}', space=vmem, size = 0x4000, scoped, tag = 'output window, operand 0']
    %12 = vsyncpa [#allocation5], 0
    %s13 = scalar_lea.sflag [#allocation5], 1
    %14 = vsyncpa %s13, 0
    %15 = vsyncpa [#allocation8], 0
    %s16 = scalar_lea.sflag [#allocation8], 1
    %17 = vsyncpa %s16, 0
    %18 = vsyncpa [#allocation6], 0
    %s19 = scalar_lea.sflag [#allocation6], 1
    %20 = vsyncpa %s19, 0
    loop: start=0, step=1, limit=10
    $region2: #{tpu_custom_call.1} parent=1 // loop_pre_header
      _
    $region3: #{tpu_custom_call.1} parent=1 // loop_header
      %s22 = sphi 0, %s26
      %p23 = scmp.ge.s32.totalorder %s22, 10
      %s29 = sphi 0, %s41
      %s30 = sphi 0, %s37
      %s31 = sphi 0, %s29
      %s32 = sphi 0, %s30
      %s33 = sphi 0, %s31
      %s34 = sphi 0, %s32
      %s44 = sphi 0, %s46
      %s47 = sphi 0, %s44
      %s48 = sphi 0, %s47
      %s64 = sphi 0, %s48
      %s70 = sphi 0, %s72
      %s73 = sphi 0, %s70
      %s74 = sphi 0, %s73
      %s90 = sphi 0, %s74
      %s98 = sphi 0, %s100
      %s101 = sphi 0, %s98
      %s102 = sphi 0, %s101
      %s118 = sphi 0, %s102
    $region4: #{tpu_custom_call.1} parent=1 // loop_header_branch
      %25 = sbr.rel (%p23) target = $region8
    $region5: #{tpu_custom_call.1} parent=1 // loop_body
      %s27 = ssub.s32 %s22, 1
      %s28 = ssub.s32 %s22, 2
      %s35 = sadd.s32 1, %s30
      %p36 = scmp.ge.s32.totalorder %s35, 4
      %s37 = scalar_select %p36, 0, %s35
      %s38 = sadd.s32 1, %s29
      %s39 = scalar_select %p36, %s38, %s29
      %p40 = scmp.ge.s32.totalorder %s39, 2
      %s41 = scalar_select %p40, 0, %s39
      %s42 = ssub.s32 %s29, %s41
      %p43 = scmp.eq.s32.totalorder %s42, 0
      %s45 = sadd.s32 %s44, 1
      %s46 = scalar_select %p43, %s44, %s45
      %p49 = pneg %p43
      %p50 = scmp.eq.s32.totalorder %s22, 7
      %p51 = por %p49, %p50
      %p52 = scmp.ne.s32.totalorder %s44, %s47
      %p53 = scmp.eq.s32.totalorder %s22, 0
      %p54 = por %p52, %p53
      %p55 = scmp.ne.s32.totalorder %s44, %s47
      %p56 = scmp.eq.s32.totalorder %s27, 7
      %p57 = por %p55, %p56
      %p58 = scmp.ne.s32.totalorder %s47, %s48
      %p59 = scmp.eq.s32.totalorder %s27, 0
      %p60 = por %p58, %p59
      %p61 = scmp.ne.s32.totalorder %s47, %s48
      %p62 = scmp.eq.s32.totalorder %s28, 7
      %p63 = por %p61, %p62
      %p65 = scmp.ne.s32.totalorder %s48, %s64
      %p66 = scmp.eq.s32.totalorder %s28, 0
      %p67 = por %p65, %p66
      %s68 = ssub.s32 %s29, %s41
      %p69 = scmp.eq.s32.totalorder %s68, 0
      %s71 = sadd.s32 %s70, 1
      %s72 = scalar_select %p69, %s70, %s71
      %p75 = pneg %p69
      %p76 = scmp.eq.s32.totalorder %s22, 7
      %p77 = por %p75, %p76
      %p78 = scmp.ne.s32.totalorder %s70, %s73
      %p79 = scmp.eq.s32.totalorder %s22, 0
      %p80 = por %p78, %p79
      %p81 = scmp.ne.s32.totalorder %s70, %s73
      %p82 = scmp.eq.s32.totalorder %s27, 7
      %p83 = por %p81, %p82
      %p84 = scmp.ne.s32.totalorder %s73, %s74
      %p85 = scmp.eq.s32.totalorder %s27, 0
      %p86 = por %p84, %p85
      %p87 = scmp.ne.s32.totalorder %s73, %s74
      %p88 = scmp.eq.s32.totalorder %s28, 7
      %p89 = por %p87, %p88
      %p91 = scmp.ne.s32.totalorder %s74, %s90
      %p92 = scmp.eq.s32.totalorder %s28, 0
      %p93 = por %p91, %p92
      %s94 = ssub.s32 %s29, %s41
      %s95 = ssub.s32 %s30, %s37
      %s96 = sor.u32 %s94, %s95
      %p97 = scmp.eq.s32.totalorder %s96, 0
      %s99 = sadd.s32 %s98, 1
      %s100 = scalar_select %p97, %s98, %s99
      %p103 = pneg %p97
      %p104 = scmp.eq.s32.totalorder %s22, 7
      %p105 = por %p103, %p104
      %p106 = scmp.ne.s32.totalorder %s98, %s101
      %p107 = scmp.eq.s32.totalorder %s22, 0
      %p108 = por %p106, %p107
      %p109 = scmp.ne.s32.totalorder %s98, %s101
      %p110 = scmp.eq.s32.totalorder %s27, 7
      %p111 = por %p109, %p110
      %p112 = scmp.ne.s32.totalorder %s101, %s102
      %p113 = scmp.eq.s32.totalorder %s27, 0
      %p114 = por %p112, %p113
      %p115 = scmp.ne.s32.totalorder %s101, %s102
      %p116 = scmp.eq.s32.totalorder %s28, 7
      %p117 = por %p115, %p116
      %p119 = scmp.ne.s32.totalorder %s102, %s118
      %p120 = scmp.eq.s32.totalorder %s28, 0
      %p121 = por %p119, %p120
      %p122 = scmp.le.s32.totalorder 1, %s22
      %p123 = scmp.lt.s32.totalorder %s22, 9
      %p124 = pnand %p122, %p123
      %p125 = pneg %p124
      // Predicated region
      $region9: #{tpu_custom_call.1} parent=5 // pred_check
        _
      $region10: #{tpu_custom_call.1} parent=5 // pred_check_branch
        %127 = sbr.rel (%p124) target = $region12
      $region11: #{tpu_custom_call.1} parent=5 // pred_region
        %s128 = ssub.s32 %s22, 1
      $region12: #{tpu_custom_call.1} parent=5 // pred_fallthru
        _
      %p129 = scmp.lt.s32.totalorder %s22, 8
      // Predicated region
      $region13: #{tpu_custom_call.1} parent=5 // pred_check
        %p130 = pneg %p129
      $region14: #{tpu_custom_call.1} parent=5 // pred_check_branch
        %132 = sbr.rel (%p130) target = $region16
      $region15: #{tpu_custom_call.1} parent=5 // pred_region
        // Predicated region
        $region17: #{tpu_custom_call.1} parent=15 // pred_check
          %p133 = pneg %p54
        $region18: #{tpu_custom_call.1} parent=15 // pred_check_branch
          %135 = sbr.rel (%p133) target = $region20
        $region19: #{tpu_custom_call.1} parent=15 // pred_region
          %s136 = sand.u32 %s44, 1
          %s137 = scalar_lea.sflag [#allocation5], %s136
          %s138 = sand.u32 %s44, 1
          %s139 = smul.addr %s138, 2
          %s140 = scalar_lea.vmem [#allocation4], %s139
          %s142 = ssub.s32 32, 32
          %143 = vsyncadd %s137, %s142
          %s144 = smul.addr %s29, 32
          %s145 = scalar_lea.hbm %s1, %s144
          %s147 = sshll.u32 %s140, 4
          %s148 = int_to_ptr.vmem [resolvable:$true] %s147
          %150 = dma.hbm_to_vmem [thread:$0]  %s145, 32, %s148, %s137
        $region20: #{tpu_custom_call.1} parent=15 // pred_fallthru
          _
        // Predicated region
        $region21: #{tpu_custom_call.1} parent=15 // pred_check
          %p151 = pneg %p80
        $region22: #{tpu_custom_call.1} parent=15 // pred_check_branch
          %153 = sbr.rel (%p151) target = $region24
        $region23: #{tpu_custom_call.1} parent=15 // pred_region
          %s154 = sand.u32 %s70, 1
          %s155 = scalar_lea.sflag [#allocation8], %s154
          %s156 = sand.u32 %s70, 1
          %s157 = smul.addr %s156, 8
          %s158 = scalar_lea.vmem [#allocation7], %s157
          %s160 = ssub.s32 128, 128
          %161 = vsyncadd %s155, %s160
          %s162 = smul.addr %s29, 128
          %s163 = scalar_lea.hbm %s2, %s162
          %s165 = sshll.u32 %s158, 4
          %s166 = int_to_ptr.vmem [resolvable:$true] %s165
          %168 = dma.hbm_to_vmem [thread:$0]  %s163, 128, %s166, %s155
        $region24: #{tpu_custom_call.1} parent=15 // pred_fallthru
          _
      $region16: #{tpu_custom_call.1} parent=5 // pred_fallthru
        _
      %p169 = scmp.le.s32.totalorder 1, %s22
      %p170 = scmp.lt.s32.totalorder %s22, 9
      %p171 = pnand %p169, %p170
      %p172 = pneg %p171
      // Predicated region
      $region25: #{tpu_custom_call.1} parent=5 // pred_check
        _
      $region26: #{tpu_custom_call.1} parent=5 // pred_check_branch
        %174 = sbr.rel (%p171) target = $region28
      $region27: #{tpu_custom_call.1} parent=5 // pred_region
        %s175 = ssub.s32 %s22, 1
        %s176 = sand.u32 %s47, 1
        %s177 = scalar_lea.sflag [#allocation5], %s176
        %s178 = sand.u32 %s47, 1
        %s179 = smul.addr %s178, 2
        %s180 = scalar_lea.vmem [#allocation4], %s179
        // Predicated region
        $region29: #{tpu_custom_call.1} parent=27 // pred_check
          %p181 = pneg %p60
        $region30: #{tpu_custom_call.1} parent=27 // pred_check_branch
          %183 = sbr.rel (%p181) target = $region32
        $region31: #{tpu_custom_call.1} parent=27 // pred_region
          %184 = dma.done %s177, 32
        $region32: #{tpu_custom_call.1} parent=27 // pred_fallthru
          _
        %s185 = sand.u32 %s73, 1
        %s186 = scalar_lea.sflag [#allocation8], %s185
        %s187 = sand.u32 %s73, 1
        %s188 = smul.addr %s187, 8
        %s189 = scalar_lea.vmem [#allocation7], %s188
        // Predicated region
        $region33: #{tpu_custom_call.1} parent=27 // pred_check
          %p190 = pneg %p86
        $region34: #{tpu_custom_call.1} parent=27 // pred_check_branch
          %192 = sbr.rel (%p190) target = $region36
        $region35: #{tpu_custom_call.1} parent=27 // pred_region
          %193 = dma.done %s186, 128
        $region36: #{tpu_custom_call.1} parent=27 // pred_fallthru
          _
        %s194 = sand.u32 %s47, 1
        %s195 = scalar_lea.sflag [#allocation5], %s194
        %s196 = sand.u32 %s47, 1
        %s197 = smul.addr %s196, 2
        %s198 = scalar_lea.vmem [#allocation4], %s197
        %p199 = pneg %p60
        %p200 = pneg %p57
        %s201 = sand.u32 %s73, 1
        %s202 = scalar_lea.sflag [#allocation8], %s201
        %s203 = sand.u32 %s73, 1
        %s204 = smul.addr %s203, 8
        %s205 = scalar_lea.vmem [#allocation7], %s204
        %p206 = pneg %p86
        %p207 = pneg %p83
        %p208 = pneg %p114
        %p209 = pneg %p111
        %s210 = sand.u32 %s101, 1
        %s211 = scalar_lea.sflag [#allocation6], %s210
        %s212 = sand.u32 %s101, 1
        %s213 = smul.addr %s212, 16
        %s214 = scalar_lea.vmem [#allocation9], %s213
        %s215 = smul.u32 2, %s32
        %s216 = smul.u32 %s32, 16
        %s217 = sld [smem:[#allocation3 + %s31]]
        %p218 = scmp.lt.s32.totalorder %s216, %s217
        // Predicated region
        $region37: #{tpu_custom_call.1} parent=27 // pred_check
          %p219 = pneg %p218
        $region38: #{tpu_custom_call.1} parent=27 // pred_check_branch
          %221 = sbr.rel (%p219) target = $region40
        $region39: #{tpu_custom_call.1} parent=27 // pred_region
          %v222 = vld [vmem:[%s180] sm:$0x3]
          %v223 = vlaneseq
          %v224 = vshrl.u32 %v223, 7
          %v225 = vadd.s32 %v224, 8
          %v226 = vstv %s216
          %v227 = vadd.s32 %v226, %v224
          %v228 = vadd.s32 %v226, %v225
          %v229 = vlaneseq
          %v230 = vshrl.u32 %v229, 7
          %v231 = vsub.s32 0, %v230
          %v232 = vrot.slane %v222, %v231
          %vm233 = vcmp.ge.s32.totalorder %v227, %v232
          %vm234 = vcmp.ge.s32.totalorder %v228, %v232
          %v235 = vlaneseq
          %v236 = vshrl.u32 %v235, 7
          %v237 = vsub.s32 1, %v236
          %v238 = vrot.slane %v222, %v237
          %vm239 = vcmp.lt.s32.totalorder %v227, %v238
          %vm240 = vcmp.lt.s32.totalorder %v228, %v238
          %vm241 = vmand %vm233, %vm239
          %vm242 = vmand %vm234, %vm240
          %v243 = vsel %vm241, 1, 0
          %v244 = vsel %vm242, 1, 0
          %v245 = vcvt.s32.f32 %v243
          %v246 = vcvt.s32.f32 %v244
          %v247 = vld [vmem:[%s189] sm:$0xff]
          %vm248 = vcmask 64512
          %v250 = vsel %vm248, %v245, 0
          %v253 = vsel %vm248, %v246, 0
          %255 = vmatprep.subr.mxu0 0.0
          %256 = vmatpush1.msra.mxu0 %v247
          %257 = vmatprep.subr.mxu0 0.0
          %258 = vmatpush1.msra.mxu0 0.0
          %259 = vmatprep.subr.mxu0 0.0
          %260 = vmatpush1.msra.mxu0 0.0
          %261 = vmatprep.subr.mxu0 0.0
          %262 = vmatpush1.msra.mxu0 0.0
          %263 = vmatprep.subr.mxu0 0.0
          %264 = vmatpush1.msra.mxu0 0.0
          %265 = vmatprep.subr.mxu0 0.0
          %266 = vmatpush1.msra.mxu0 0.0
          %267 = vmatprep.subr.mxu0 0.0
          %268 = vmatpush1.msra.mxu0 0.0
          %269 = vmatprep.subr.mxu0 0.0
          %270 = vmatpush1.msra.mxu0 0.0
          %271 = vmatprep.subr.mxu0 0.0
          %272 = vmatpush1.msra.mxu0 0.0
          %273 = vmatprep.subr.mxu0 0.0
          %274 = vmatpush1.msra.mxu0 0.0
          %275 = vmatprep.subr.mxu0 0.0
          %276 = vmatpush1.msra.mxu0 0.0
          %277 = vmatprep.subr.mxu0 0.0
          %278 = vmatpush1.msra.mxu0 0.0
          %279 = vmatprep.subr.mxu0 0.0
          %280 = vmatpush1.msra.mxu0 0.0
          %281 = vmatprep.subr.mxu0 0.0
          %282 = vmatpush1.msra.mxu0 0.0
          %283 = vmatprep.subr.mxu0 0.0
          %284 = vmatpush1.msra.mxu0 0.0
          %285 = vmatprep.subr.mxu0 0.0
          %286 = vmatpush1.msra.mxu0 0.0
          %287 = vmatprep.subr.mxu0 0.0
          %288 = vmatpush1.msra.mxu0 0.0
          %289 = vmatprep.subr.mxu0 0.0
          %290 = vmatpush1.msra.mxu0 0.0
          %291 = vmatprep.subr.mxu0 0.0
          %292 = vmatpush1.msra.mxu0 0.0
          %293 = vmatprep.subr.mxu0 0.0
          %294 = vmatpush1.msra.mxu0 0.0
          %295 = vmatprep.subr.mxu0 0.0
          %296 = vmatpush1.msra.mxu0 0.0
          %297 = vmatprep.subr.mxu0 0.0
          %298 = vmatpush1.msra.mxu0 0.0
          %299 = vmatprep.subr.mxu0 0.0
          %300 = vmatpush1.msra.mxu0 0.0
          %301 = vmatprep.subr.mxu0 0.0
          %302 = vmatpush1.msra.mxu0 0.0
          %303 = vmatprep.subr.mxu0 0.0
          %304 = vmatpush1.msra.mxu0 0.0
          %305 = vmatprep.subr.mxu0 0.0
          %306 = vmatpush1.msra.mxu0 0.0
          %307 = vmatprep.subr.mxu0 0.0
          %308 = vmatpush1.msra.mxu0 0.0
          %309 = vmatprep.subr.mxu0 0.0
          %310 = vmatpush1.msra.mxu0 0.0
          %311 = vmatprep.subr.mxu0 0.0
          %312 = vmatpush1.msra.mxu0 0.0
          %313 = vmatprep.subr.mxu0 0.0
          %314 = vmatpush1.msra.mxu0 0.0
          %315 = vmatprep.subr.mxu0 0.0
          %316 = vmatpush1.msra.mxu0 0.0
          %317 = vmatprep.subr.mxu0 0.0
          %318 = vmatpush1.msra.mxu0 0.0
          %319 = vmatprep.mubr.f32.mxu0 0.0
          %320 = vmatmul.mubr.f32.gmra.mrb[0].mxu0 %v250
          %v321 = vpop.f32.mrb[0].mxu0
          %v322 = vadd.f32 0.0, %v321
          %v323 = vpop.f32.mrb[0].mxu0
          %324 = vmatprep.mubr.f32.mxu0 0.0
          %325 = vmatmul.mubr.f32.gmra.mrb[0].mxu0 %v253
          %v326 = vpop.f32.mrb[0].mxu0
          %v327 = vadd.f32 0.0, %v326
          %v328 = vpop.f32.mrb[0].mxu0
          %329 = vdwg.mxu0
          %330 = vst [vmem:[%s214] sm:$0xff] %v322
          %331 = vst [vmem:[%s214 + $0x8] sm:$0xff] %v327
        $region40: #{tpu_custom_call.1} parent=27 // pred_fallthru
          _
        %p332 = scmp.ge.s32.totalorder %s216, %s217
        // Predicated region
        $region41: #{tpu_custom_call.1} parent=27 // pred_check
          %p333 = pneg %p332
        $region42: #{tpu_custom_call.1} parent=27 // pred_check_branch
          %335 = sbr.rel (%p333) target = $region44
        $region43: #{tpu_custom_call.1} parent=27 // pred_region
          %336 = vst [vmem:[%s214] sm:$0xff] 0.0
          %337 = vst [vmem:[%s214 + $0x8] sm:$0xff] 0.0
        $region44: #{tpu_custom_call.1} parent=27 // pred_fallthru
          _
        %s338 = sand.u32 %s101, 1
        %s339 = scalar_lea.sflag [#allocation6], %s338
        %s340 = sand.u32 %s101, 1
        %s341 = smul.addr %s340, 16
        %s342 = scalar_lea.vmem [#allocation9], %s341
        // Predicated region
        $region45: #{tpu_custom_call.1} parent=27 // pred_check
          %p343 = pneg %p111
        $region46: #{tpu_custom_call.1} parent=27 // pred_check_branch
          %345 = sbr.rel (%p343) target = $region48
        $region47: #{tpu_custom_call.1} parent=27 // pred_region
          %s346 = smul.u32 2, %s32
          %s348 = ssub.s32 256, 256
          %349 = vsyncadd %s339, %s348
          %s350 = smul.addr %s31, 8
          %s351 = sadd.s32 %s346, %s350
          %s352 = smul.addr %s351, 128
          %s353 = scalar_lea.hbm %s3, %s352
          %s354 = sshll.u32 %s342, 4
          %s355 = int_to_ptr.vmem [resolvable:$true] %s354
          %360 = dma.vmem_to_hbm [thread:$0]  %s355, 256, %s353, %s339, 128, 128, 8
        $region48: #{tpu_custom_call.1} parent=27 // pred_fallthru
          _
      $region28: #{tpu_custom_call.1} parent=5 // pred_fallthru
        _
      %p361 = scmp.le.s32.totalorder 2, %s22
      // Predicated region
      $region49: #{tpu_custom_call.1} parent=5 // pred_check
        %p362 = pneg %p361
      $region50: #{tpu_custom_call.1} parent=5 // pred_check_branch
        %364 = sbr.rel (%p362) target = $region52
      $region51: #{tpu_custom_call.1} parent=5 // pred_region
        %s365 = ssub.s32 %s22, 2
        // Predicated region
        $region53: #{tpu_custom_call.1} parent=51 // pred_check
          %p366 = pneg %p117
        $region54: #{tpu_custom_call.1} parent=51 // pred_check_branch
          %368 = sbr.rel (%p366) target = $region56
        $region55: #{tpu_custom_call.1} parent=51 // pred_region
          %s369 = sand.u32 %s102, 1
          %s370 = scalar_lea.sflag [#allocation6], %s369
          %s371 = sand.u32 %s102, 1
          %s372 = smul.addr %s371, 16
          %s373 = scalar_lea.vmem [#allocation9], %s372
          %374 = dma.done %s370, 256
        $region56: #{tpu_custom_call.1} parent=51 // pred_fallthru
          _
      $region52: #{tpu_custom_call.1} parent=5 // pred_fallthru
        _
    $region6: #{tpu_custom_call.1} parent=1 // loop_footer
      %s26 = sadd.s32 1, %s22
    $region7: #{tpu_custom_call.1} parent=1 // loop_footer_branch
      %21 = sbr.rel target = $region3
    $region8: #{tpu_custom_call.1} parent=1 // loop_exit
      _
    %375 = vsyncpa [#allocation5], 1
    %s376 = scalar_lea.sflag [#allocation5], 1
    %377 = vsyncpa %s376, 1
    %378 = vsyncpa [#allocation8], 1
    %s379 = scalar_lea.sflag [#allocation8], 1
    %380 = vsyncpa %s379, 1
    %381 = vsyncpa [#allocation6], 1
    %s382 = scalar_lea.sflag [#allocation6], 1
    %383 = vsyncpa %s382, 1

</llo_original>
